<compile_context>
chip_gen: v7x
topology: tpu7x:2x2x1
jax: 0.10.0
libtpu: 0.0.40
codegen_flags: <defaults>
</compile_context>

<pallas_src>
import math

import jax
import jax.numpy as jnp
from jax.experimental import pallas as pl
from jax.experimental.pallas import tpu as pltpu


def _linear_kernel(params_ref, xT_ref, oT_ref):
    # params_ref: SMEM f32[3] = [w00, w01, b]
    # xT_ref:     VMEM f32[2, TILE_B]  (features on sublanes, batch on lanes)
    # oT_ref:     VMEM f32[1, TILE_B]  (lane-dense output block)
    w0 = params_ref[0]
    w1 = params_ref[1]
    b = params_ref[2]
    x0 = xT_ref[0:1, :]          # [1, TILE_B]
    x1 = xT_ref[1:2, :]          # [1, TILE_B]
    oT_ref[...] = (x0 * w0 + x1 * w1 + b).astype(oT_ref.dtype)


def linear_forward(x, weight, bias, *, tile_b=8192, min_pallas_batch=4096):
    """Equivalent to torch.nn.Linear(2, 1): out = x @ weight.T + bias.

    x:      [B, 2]  float32
    weight: [1, 2]  float32  (PyTorch layout: [out_features, in_features])
    bias:   [1]     float32
    returns [B, 1]  float32
    """
    B, IN = x.shape
    OUT = weight.shape[0]
    assert IN == 2 and OUT == 1 and weight.shape[1] == 2
    assert tile_b % 128 == 0

    # Small batches: 16*B FLOPs is far below pallas_call overhead -> plain XLA.
    if B < min_pallas_batch:
        return (x @ weight.T + bias).astype(x.dtype)

    # 3 real scalars -> one small SMEM array.
    params = jnp.concatenate(
        [weight.reshape(-1), bias.reshape(-1)]).astype(jnp.float32)     # [3]

    # Lane-major batch: [2, B] so IN=2 pads only 2->8 sublanes, not 128 lanes.
    xT = x.T                                                            # [2, B]

    # Pad batch to a multiple of 128 (unmasked lane-dense stores) and to a
    # multiple of the chosen tile so every grid block is full.
    b_pad = 128 * math.ceil(B / 128)
    tile = min(tile_b, b_pad)
    if b_pad % tile != 0:
        tile = math.gcd(tile, b_pad)   # still a multiple of 128, divides b_pad
    if b_pad != B:
        xT = jnp.pad(xT, ((0, 0), (0, b_pad - B)))
    num_tiles = b_pad // tile

    outT = pl.pallas_call(
        _linear_kernel,
        out_shape=jax.ShapeDtypeStruct((OUT, b_pad), x.dtype),
        grid=(num_tiles,),
        in_specs=[
            pl.BlockSpec(memory_space=pltpu.MemorySpace.SMEM),   # params (whole)
            pl.BlockSpec((2, tile), lambda i: (0, i)),           # xT batch tile
        ],
        out_specs=pl.BlockSpec((OUT, tile), lambda i: (0, i)),
        compiler_params=pltpu.CompilerParams(
            dimension_semantics=("parallel",)),
    )(params, xT)

    # [1, b_pad] -> [b_pad, 1] is layout-identical in row-major: free reshape.
    out = outT.reshape(b_pad, OUT)
    return out[:B] if b_pad != B else out


if __name__ == "__main__":
    key = jax.random.PRNGKey(0)
    k_x1, k_x2, k_w, k_b = jax.random.split(key, 4)

    in_features, out_features = 2, 1

    # Deterministic parameter init (PyTorch Linear default:
    # U(-1/sqrt(fan_in), 1/sqrt(fan_in))).
    bound = 1.0 / jnp.sqrt(jnp.float32(in_features))
    weight = jax.random.uniform(k_w, (out_features, in_features),
                                dtype=jnp.float32, minval=-bound, maxval=bound)
    bias = jax.random.uniform(k_b, (out_features,),
                              dtype=jnp.float32, minval=-bound, maxval=bound)

    # 1) Tiny batch -> plain-XLA fallback path.
    x_small = jax.random.normal(k_x1, (8, in_features), dtype=jnp.float32)
    out_small = jax.block_until_ready(linear_forward(x_small, weight, bias))
    ref_small = x_small @ weight.T + bias
    assert out_small.shape == (8, out_features)
    assert jnp.allclose(out_small, ref_small, atol=1e-5, rtol=1e-5)

    # 2) Pallas path, multi-tile grid + tail padding (B=500 pads to 512, 4 tiles).
    x_mid = jax.random.normal(k_x2, (500, in_features), dtype=jnp.float32)
    out_mid = jax.block_until_ready(
        linear_forward(x_mid, weight, bias, tile_b=128, min_pallas_batch=0))
    ref_mid = x_mid @ weight.T + bias
    assert out_mid.shape == (500, out_features)
    assert jnp.allclose(out_mid, ref_mid, atol=1e-5, rtol=1e-5)

    # 3) Pallas path, single-tile grid (B=384 -> one 384-lane tile).
    x_big = jax.random.normal(k_x2, (384, in_features), dtype=jnp.float32)
    out_big = jax.block_until_ready(
        linear_forward(x_big, weight, bias, min_pallas_batch=0))
    ref_big = x_big @ weight.T + bias
    assert out_big.shape == (384, out_features)
    assert jnp.allclose(out_big, ref_big, atol=1e-5, rtol=1e-5)

    print("KERNEL_OK")
</pallas_src>

<mosaic_0001>
module attributes {stable_mosaic.version = 11 : i64} {
  func.func @_linear_kernel(%arg0: i32, %arg1: memref<3xf32, #tpu.memory_space<smem>>, %arg2: memref<2x128xf32, #tpu.memory_space<vmem>>, %arg3: memref<1x128xf32, #tpu.memory_space<vmem>>) attributes {dimension_semantics = [#tpu.dimension_semantics<parallel>], iteration_bounds = array<i64: 4>, scalar_prefetch = 0 : i64, scratch_operands = 0 : i64, tpu.core_type = #tpu.core_type<tc>, window_params = [{transform_indices = @transform_0, window_bounds = array<i64: 3>}, {transform_indices = @transform_1, window_bounds = array<i64: 2, 128>}, {transform_indices = @transform_2, window_bounds = array<i64: 1, 128>}]} {
    %c0 = arith.constant 0 : index
    %0 = memref.load %arg1[%c0] : memref<3xf32, #tpu.memory_space<smem>>
    %c1 = arith.constant 1 : index
    %1 = memref.load %arg1[%c1] : memref<3xf32, #tpu.memory_space<smem>>
    %c2 = arith.constant 2 : index
    %2 = memref.load %arg1[%c2] : memref<3xf32, #tpu.memory_space<smem>>
    %c0_0 = arith.constant 0 : index
    %c0_1 = arith.constant 0 : index
    %3 = vector.load %arg2[%c0_0, %c0_1] : memref<2x128xf32, #tpu.memory_space<vmem>>, vector<1x128xf32>
    %c1_2 = arith.constant 1 : index
    %c0_3 = arith.constant 0 : index
    %4 = vector.load %arg2[%c1_2, %c0_3] : memref<2x128xf32, #tpu.memory_space<vmem>>, vector<1x128xf32>
    %5 = vector.broadcast %0 : f32 to vector<1x128xf32>
    %6 = arith.mulf %3, %5 : vector<1x128xf32>
    %7 = vector.broadcast %1 : f32 to vector<1x128xf32>
    %8 = arith.mulf %4, %7 : vector<1x128xf32>
    %9 = arith.addf %6, %8 : vector<1x128xf32>
    %10 = vector.broadcast %2 : f32 to vector<1x128xf32>
    %11 = arith.addf %9, %10 : vector<1x128xf32>
    %c0_4 = arith.constant 0 : index
    %c0_5 = arith.constant 0 : index
    %12 = vector.load %arg3[%c0_4, %c0_5] : memref<1x128xf32, #tpu.memory_space<vmem>>, vector<1x128xf32>
    tpu.vector_store %arg3[%c0_4, %c0_5], %11 {strides = array<i32>} : memref<1x128xf32, #tpu.memory_space<vmem>>, vector<1x128xf32>,
    return
  }
  func.func @transform_0(%arg0: i32) -> i32 {
    %c0_i32 = arith.constant 0 : i32
    %c0_i32_0 = arith.constant 0 : i32
    return %c0_i32 : i32
  }
  func.func @transform_1(%arg0: i32) -> (i32, i32) {
    %c0_i32 = arith.constant 0 : i32
    %c0_i32_0 = arith.constant 0 : i32
    return %c0_i32, %arg0 : i32, i32
  }
  func.func @transform_2(%arg0: i32) -> (i32, i32) {
    %c0_i32 = arith.constant 0 : i32
    %c0_i32_0 = arith.constant 0 : i32
    return %c0_i32, %arg0 : i32, i32
  }
}

</mosaic_0001>

<llo_original>
// kernel: tpu_custom_call.1
$region0: #{tpu_custom_call.1}
  #allocation0 [shape = 'u32[]', space=smem, size = 0x4, offset = 0x4, fixed_abs, tag = 'smem constant byte address 0x4 - core index']
  #allocation1 [shape = 'u32[144,128]{1,0:T(1,128)}', space=vmem, size = 0x12000, scoped, tag = 'internal scratch']
  %s0 = inlined_call_operand.hbm [shape: f32[3], index: 0, kind: input, shape index: {}]
  %s1 = inlined_call_operand.hbm [shape: f32[2,512], index: 1, kind: input, shape index: {}]
  %s2 = inlined_call_operand.hbm [shape: f32[1,512], index: 2, kind: output, shape index: {}]
  %s3 = sld [smem:[#allocation0]]
  $region49: #{tpu_custom_call.1} parent=0
    _
  %s5 = ssub.s32 1, %s3
  %s6 = scalar_select 0, %s5, %s3
  $region1: #{tpu_custom_call.1} parent=0
    #allocation2 [shape = 'u8[512]{0}', space=smem, size = 0x200, scoped, tag = 'input window, operand 0, single buffered']
    #allocation3 [shape = 's32[2]{0}', space=sflag, size = 0x8, scoped, tag = 'scoped memory for tpu_custom_call.1']
    #allocation4 [shape = 's32[2]{0}', space=sflag, size = 0x8, scoped, tag = 'scoped memory for tpu_custom_call.1']
    #allocation5 [shape = 's32[2]{0}', space=sflag, size = 0x8, scoped, tag = 'scoped memory for tpu_custom_call.1']
    #allocation6 [shape = 'u8[2048]{0}', space=vmem, size = 0x800, scoped, tag = 'input window, operand 1']
    #allocation7 [shape = 'u8[1024]{0}', space=vmem, size = 0x400, scoped, tag = 'output window, operand 0']
    %7 = vsyncpa [#allocation5], 0
    %8 = vsyncpa [#allocation3], 0
    %s9 = scalar_lea.sflag [#allocation3], 1
    %10 = vsyncpa %s9, 0
    %11 = vsyncpa [#allocation4], 0
    %s12 = scalar_lea.sflag [#allocation4], 1
    %13 = vsyncpa %s12, 0
    loop: start=0, step=1, limit=6
    $region2: #{tpu_custom_call.1} parent=1 // loop_pre_header
      _
    $region3: #{tpu_custom_call.1} parent=1 // loop_header
      %s15 = sphi 0, %s19
      %p16 = scmp.ge.s32.totalorder %s15, 6
      %s23 = sphi 0, %s23
      %s25 = sphi 0, %s23
      %s26 = sphi 0, %s25
      %s40 = sphi 0, %s26
      %s46 = sphi 0, %s48
      %s49 = sphi 0, %s46
      %s50 = sphi 0, %s49
      %s66 = sphi 0, %s50
      %s72 = sphi 0, %s74
      %s75 = sphi 0, %s72
      %s76 = sphi 0, %s75
      %s92 = sphi 0, %s76
    $region4: #{tpu_custom_call.1} parent=1 // loop_header_branch
      %18 = sbr.rel (%p16) target = $region8
    $region5: #{tpu_custom_call.1} parent=1 // loop_body
      %s20 = ssub.s32 %s15, 1
      %s21 = ssub.s32 %s15, 2
      %s22 = sadd.s32 %s15, 1
      %s24 = sadd.s32 %s23, 1
      %p27 = scmp.eq.s32.totalorder %s15, 3
      %p28 = scmp.ne.s32.totalorder %s23, %s25
      %p29 = scmp.eq.s32.totalorder %s15, 0
      %p30 = por %p28, %p29
      %p31 = scmp.ne.s32.totalorder %s23, %s25
      %p32 = scmp.eq.s32.totalorder %s20, 3
      %p33 = por %p31, %p32
      %p34 = scmp.ne.s32.totalorder %s25, %s26
      %p35 = scmp.eq.s32.totalorder %s20, 0
      %p36 = por %p34, %p35
      %p37 = scmp.ne.s32.totalorder %s25, %s26
      %p38 = scmp.eq.s32.totalorder %s21, 3
      %p39 = por %p37, %p38
      %p41 = scmp.ne.s32.totalorder %s26, %s40
      %p42 = scmp.eq.s32.totalorder %s21, 0
      %p43 = por %p41, %p42
      %s44 = ssub.s32 %s15, %s22
      %p45 = scmp.eq.s32.totalorder %s44, 0
      %s47 = sadd.s32 %s46, 1
      %s48 = scalar_select %p45, %s46, %s47
      %p51 = pneg %p45
      %p52 = scmp.eq.s32.totalorder %s15, 3
      %p53 = por %p51, %p52
      %p54 = scmp.ne.s32.totalorder %s46, %s49
      %p55 = scmp.eq.s32.totalorder %s15, 0
      %p56 = por %p54, %p55
      %p57 = scmp.ne.s32.totalorder %s46, %s49
      %p58 = scmp.eq.s32.totalorder %s20, 3
      %p59 = por %p57, %p58
      %p60 = scmp.ne.s32.totalorder %s49, %s50
      %p61 = scmp.eq.s32.totalorder %s20, 0
      %p62 = por %p60, %p61
      %p63 = scmp.ne.s32.totalorder %s49, %s50
      %p64 = scmp.eq.s32.totalorder %s21, 3
      %p65 = por %p63, %p64
      %p67 = scmp.ne.s32.totalorder %s50, %s66
      %p68 = scmp.eq.s32.totalorder %s21, 0
      %p69 = por %p67, %p68
      %s70 = ssub.s32 %s15, %s22
      %p71 = scmp.eq.s32.totalorder %s70, 0
      %s73 = sadd.s32 %s72, 1
      %s74 = scalar_select %p71, %s72, %s73
      %p77 = pneg %p71
      %p78 = scmp.eq.s32.totalorder %s15, 3
      %p79 = por %p77, %p78
      %p80 = scmp.ne.s32.totalorder %s72, %s75
      %p81 = scmp.eq.s32.totalorder %s15, 0
      %p82 = por %p80, %p81
      %p83 = scmp.ne.s32.totalorder %s72, %s75
      %p84 = scmp.eq.s32.totalorder %s20, 3
      %p85 = por %p83, %p84
      %p86 = scmp.ne.s32.totalorder %s75, %s76
      %p87 = scmp.eq.s32.totalorder %s20, 0
      %p88 = por %p86, %p87
      %p89 = scmp.ne.s32.totalorder %s75, %s76
      %p90 = scmp.eq.s32.totalorder %s21, 3
      %p91 = por %p89, %p90
      %p93 = scmp.ne.s32.totalorder %s76, %s92
      %p94 = scmp.eq.s32.totalorder %s21, 0
      %p95 = por %p93, %p94
      %p96 = scmp.le.s32.totalorder 1, %s15
      %p97 = scmp.lt.s32.totalorder %s15, 5
      %p98 = pnand %p96, %p97
      %p99 = pneg %p98
      // Predicated region
      $region9: #{tpu_custom_call.1} parent=5 // pred_check
        _
      $region10: #{tpu_custom_call.1} parent=5 // pred_check_branch
        %101 = sbr.rel (%p98) target = $region12
      $region11: #{tpu_custom_call.1} parent=5 // pred_region
        %s102 = ssub.s32 %s15, 1
        // Predicated region
        $region13: #{tpu_custom_call.1} parent=11 // pred_check
          %p103 = pneg %p36
        $region14: #{tpu_custom_call.1} parent=11 // pred_check_branch
          %105 = sbr.rel (%p103) target = $region16
        $region15: #{tpu_custom_call.1} parent=11 // pred_region
          %s107 = ssub.s32 16, 16
          %108 = vsyncadd [#allocation5], %s107
          %111 = dma.hbm_to_smem %s0, 16, [#allocation2], [#allocation5]
        $region16: #{tpu_custom_call.1} parent=11 // pred_fallthru
          _
      $region12: #{tpu_custom_call.1} parent=5 // pred_fallthru
        _
      %p112 = scmp.lt.s32.totalorder %s15, 4
      // Predicated region
      $region17: #{tpu_custom_call.1} parent=5 // pred_check
        %p113 = pneg %p112
      $region18: #{tpu_custom_call.1} parent=5 // pred_check_branch
        %115 = sbr.rel (%p113) target = $region20
      $region19: #{tpu_custom_call.1} parent=5 // pred_region
        // Predicated region
        $region21: #{tpu_custom_call.1} parent=19 // pred_check
          %p116 = pneg %p56
        $region22: #{tpu_custom_call.1} parent=19 // pred_check_branch
          %118 = sbr.rel (%p116) target = $region24
        $region23: #{tpu_custom_call.1} parent=19 // pred_region
          %s119 = sand.u32 %s46, 1
          %s120 = scalar_lea.sflag [#allocation3], %s119
          %s121 = sand.u32 %s46, 1
          %s122 = smul.addr %s121, 2
          %s123 = scalar_lea.vmem [#allocation6], %s122
          %s125 = ssub.s32 32, 32
          %126 = vsyncadd %s120, %s125
          %s127 = smul.addr %s15, 32
          %s128 = scalar_lea.hbm %s1, %s127
          %s130 = sshll.u32 %s123, 4
          %s131 = int_to_ptr.vmem [resolvable:$true] %s130
          %133 = dma.hbm_to_vmem [thread:$0]  %s128, 32, %s131, %s120
        $region24: #{tpu_custom_call.1} parent=19 // pred_fallthru
          _
      $region20: #{tpu_custom_call.1} parent=5 // pred_fallthru
        _
      %p134 = scmp.le.s32.totalorder 1, %s15
      %p135 = scmp.lt.s32.totalorder %s15, 5
      %p136 = pnand %p134, %p135
      %p137 = pneg %p136
      // Predicated region
      $region25: #{tpu_custom_call.1} parent=5 // pred_check
        _
      $region26: #{tpu_custom_call.1} parent=5 // pred_check_branch
        %139 = sbr.rel (%p136) target = $region28
      $region27: #{tpu_custom_call.1} parent=5 // pred_region
        %s140 = ssub.s32 %s15, 1
        // Predicated region
        $region29: #{tpu_custom_call.1} parent=27 // pred_check
          %p141 = pneg %p36
        $region30: #{tpu_custom_call.1} parent=27 // pred_check_branch
          %143 = sbr.rel (%p141) target = $region32
        $region31: #{tpu_custom_call.1} parent=27 // pred_region
          %144 = dma.done [#allocation5], 16
        $region32: #{tpu_custom_call.1} parent=27 // pred_fallthru
          _
        %s145 = sand.u32 %s49, 1
        %s146 = scalar_lea.sflag [#allocation3], %s145
        %s147 = sand.u32 %s49, 1
        %s148 = smul.addr %s147, 2
        %s149 = scalar_lea.vmem [#allocation6], %s148
        // Predicated region
        $region33: #{tpu_custom_call.1} parent=27 // pred_check
          %p150 = pneg %p62
        $region34: #{tpu_custom_call.1} parent=27 // pred_check_branch
          %152 = sbr.rel (%p150) target = $region36
        $region35: #{tpu_custom_call.1} parent=27 // pred_region
          %153 = dma.done %s146, 32
        $region36: #{tpu_custom_call.1} parent=27 // pred_fallthru
          _
        %154 = sfence
        %p155 = pneg %p36
        %p156 = pneg %p33
        %s157 = sand.u32 %s49, 1
        %s158 = scalar_lea.sflag [#allocation3], %s157
        %s159 = sand.u32 %s49, 1
        %s160 = smul.addr %s159, 2
        %s161 = scalar_lea.vmem [#allocation6], %s160
        %p162 = pneg %p62
        %p163 = pneg %p59
        %p164 = pneg %p88
        %p165 = pneg %p85
        %s166 = sand.u32 %s75, 1
        %s167 = scalar_lea.sflag [#allocation4], %s166
        %s168 = sand.u32 %s75, 1
        %s169 = scalar_lea.vmem [#allocation7], %s168
        %s170 = sld [smem:[#allocation2]]
        %s171 = sld [smem:[#allocation2 + $0x1]]
        %s172 = sld [smem:[#allocation2 + $0x2]]
        %v173 = vld [vmem:[%s149] sm:$0x1]
        %v174 = vld [vmem:[%s149 + $0x1] sm:$0x1]
        %v175 = vstv %s170
        %v176 = vmul.f32 %v173, %v175
        %v177 = vstv %s171
        %v178 = vmul.f32 %v174, %v177
        %v179 = vadd.f32 %v176, %v178
        %v180 = vstv %s172
        %v181 = vadd.f32 %v179, %v180
        %182 = vst [vmem:[%s169] sm:$0x1] %v181
        %s183 = sand.u32 %s75, 1
        %s184 = scalar_lea.sflag [#allocation4], %s183
        %s185 = sand.u32 %s75, 1
        %s186 = scalar_lea.vmem [#allocation7], %s185
        // Predicated region
        $region37: #{tpu_custom_call.1} parent=27 // pred_check
          %p187 = pneg %p85
        $region38: #{tpu_custom_call.1} parent=27 // pred_check_branch
          %189 = sbr.rel (%p187) target = $region40
        $region39: #{tpu_custom_call.1} parent=27 // pred_region
          %s191 = ssub.s32 16, 16
          %192 = vsyncadd %s184, %s191
          %s193 = smul.addr %s20, 16
          %s194 = scalar_lea.hbm %s2, %s193
          %s196 = sshll.u32 %s186, 4
          %s197 = int_to_ptr.vmem [resolvable:$true] %s196
          %199 = dma.vmem_to_hbm [thread:$0]  %s197, 16, %s194, %s184
        $region40: #{tpu_custom_call.1} parent=27 // pred_fallthru
          _
      $region28: #{tpu_custom_call.1} parent=5 // pred_fallthru
        _
      %p200 = scmp.le.s32.totalorder 2, %s15
      // Predicated region
      $region41: #{tpu_custom_call.1} parent=5 // pred_check
        %p201 = pneg %p200
      $region42: #{tpu_custom_call.1} parent=5 // pred_check_branch
        %203 = sbr.rel (%p201) target = $region44
      $region43: #{tpu_custom_call.1} parent=5 // pred_region
        %s204 = ssub.s32 %s15, 2
        // Predicated region
        $region45: #{tpu_custom_call.1} parent=43 // pred_check
          %p205 = pneg %p91
        $region46: #{tpu_custom_call.1} parent=43 // pred_check_branch
          %207 = sbr.rel (%p205) target = $region48
        $region47: #{tpu_custom_call.1} parent=43 // pred_region
          %s208 = sand.u32 %s76, 1
          %s209 = scalar_lea.sflag [#allocation4], %s208
          %s210 = sand.u32 %s76, 1
          %s211 = scalar_lea.vmem [#allocation7], %s210
          %212 = dma.done %s209, 16
        $region48: #{tpu_custom_call.1} parent=43 // pred_fallthru
          _
      $region44: #{tpu_custom_call.1} parent=5 // pred_fallthru
        _
    $region6: #{tpu_custom_call.1} parent=1 // loop_footer
      %s19 = sadd.s32 1, %s15
    $region7: #{tpu_custom_call.1} parent=1 // loop_footer_branch
      %14 = sbr.rel target = $region3
    $region8: #{tpu_custom_call.1} parent=1 // loop_exit
      _
    %213 = vsyncpa [#allocation3], 1
    %s214 = scalar_lea.sflag [#allocation3], 1
    %215 = vsyncpa %s214, 1
    %216 = vsyncpa [#allocation4], 1
    %s217 = scalar_lea.sflag [#allocation4], 1
    %218 = vsyncpa %s217, 1
    %219 = vsyncpa [#allocation5], 1
    %s220 = scalar_lea.sflag [#allocation5], 1
    %221 = vsyncpa %s220, 1

</llo_original>
